<compile_context>
chip_gen: v6e
topology: v6e:2x2x1
jax: 0.10.0
libtpu: 0.0.40
codegen_flags: <defaults>
</compile_context>

<pallas_src>
import jax
import jax.numpy as jnp
from jax.experimental import pallas as pl
from jax.experimental.pallas import tpu as pltpu

INPUT_D = 32
HIDDEN_D = 32
OUTPUT_D = 16
LANE_PAD = 128          # lane-dense padded output width (multiple of 128)
LN_EPS = 1e-5


def mlp_kernel(x_ref, w01_ref, w2_ref, p32_ref, b2_ref, out_ref):
    """Fused [LN->ReLU] -> Lin -> LN->ReLU -> Lin -> LN->ReLU -> Lin (lane-padded).

    p32_ref rows: 0=b0, 1=b1, 2..4=gamma0..2, 5..7=beta0..2  (all width 32).
    w2_ref / b2_ref are zero-padded to LANE_PAD output lanes.
    """
    inv_d = 1.0 / HIDDEN_D

    def prow(i):                         # (1, 32) static slice of the param table
        return p32_ref[i:i + 1, :]

    def activate(h, n):
        gamma, beta = prow(2 + n), prow(5 + n)
        # One-pass LayerNorm: the two reductions are independent (both XLU),
        # rsqrt lands on the EUP slot.
        s = jnp.sum(h, axis=-1, keepdims=True)
        ss = jnp.sum(h * h, axis=-1, keepdims=True)
        mean = s * inv_d
        var = ss * inv_d - mean * mean            # biased variance (PyTorch LN)
        h = (h - mean) * jax.lax.rsqrt(var + LN_EPS) * gamma + beta
        # F.relu; F.dropout(p=0.0, training=False) is the identity.
        return jnp.maximum(h, 0.0)

    h = x_ref[...]
    h = activate(h, 0)                                                   # init_activate
    h = jnp.dot(h, w01_ref[0], preferred_element_type=jnp.float32) + prow(0)
    h = activate(h, 1)
    h = jnp.dot(h, w01_ref[1], preferred_element_type=jnp.float32) + prow(1)
    h = activate(h, 2)
    h = jnp.dot(h, w2_ref[...], preferred_element_type=jnp.float32) + b2_ref[...]
    out_ref[...] = h.astype(out_ref.dtype)             # unmasked 128-lane store


def make_params(key, input_d=INPUT_D, hidden_d=HIDDEN_D, output_d=OUTPUT_D):
    """Deterministic init matching MLP.reset_params():
       xavier_normal_ weights, zero biases; LayerNorm gamma=1, beta=0."""
    dims = [(input_d, hidden_d), (hidden_d, hidden_d), (hidden_d, output_d)]
    weights, biases = [], []
    for fan_in, fan_out in dims:
        key, sub = jax.random.split(key)
        std = (2.0 / (fan_in + fan_out)) ** 0.5
        # Stored in (in, out) layout == transpose of torch's (out, in).
        weights.append(std * jax.random.normal(sub, (fan_in, fan_out), dtype=jnp.float32))
        biases.append(jnp.zeros((1, fan_out), dtype=jnp.float32))
    # norm_cnt = num_layers - 1 + init_activate = 3 LayerNorm(hidden_d) modules
    gammas = [jnp.ones((1, hidden_d), dtype=jnp.float32) for _ in range(3)]
    betas = [jnp.zeros((1, hidden_d), dtype=jnp.float32) for _ in range(3)]
    return weights, biases, gammas, betas


def mlp_forward(x, weights, biases, gammas, betas, *, tile_n=8192):
    n, input_d = x.shape
    hidden_d = weights[0].shape[1]
    output_d = weights[2].shape[1]

    # ---- stack / lane-pad parameters once, outside the kernel ----
    w01 = jnp.stack([weights[0], weights[1]], axis=0)                        # (2, 32, 32)
    w2p = jnp.zeros((hidden_d, LANE_PAD), jnp.float32).at[:, :output_d].set(weights[2])
    b2p = jnp.zeros((1, LANE_PAD), jnp.float32).at[:, :output_d].set(biases[2])
    p32 = jnp.concatenate([biases[0], biases[1],
                           gammas[0], gammas[1], gammas[2],
                           betas[0], betas[1], betas[2]], axis=0)            # (8, 32)

    # Rows per grid step: large (amortize ~0.35 us/step), multiple of 8,
    # and sized so 2x(x_tile + out_tile) + params fits the default scoped
    # VMEM on every chip generation (tile_n=8192 -> ~10.3 MiB < 16 MiB).
    tn = min(tile_n, max(8, ((n + 7) // 8) * 8))
    grid = (pl.cdiv(n, tn),)

    flops = (2 * n * (input_d * hidden_d + hidden_d * hidden_d + hidden_d * output_d)
             + 3 * n * 8 * hidden_d)                      # + LN/ReLU elementwise (rough)
    bytes_accessed = 4 * (n * input_d + n * LANE_PAD
                          + 2 * hidden_d * hidden_d + hidden_d * LANE_PAD
                          + 8 * hidden_d + LANE_PAD)
    cost = pl.CostEstimate(flops=flops, transcendentals=3 * n,
                           bytes_accessed=bytes_accessed)

    out_padded = pl.pallas_call(
        mlp_kernel,
        out_shape=jax.ShapeDtypeStruct((n, LANE_PAD), jnp.float32),
        grid=grid,
        in_specs=[
            pl.BlockSpec((tn, input_d), lambda i: (i, 0)),               # x: batch-tiled
            pl.BlockSpec((2, hidden_d, hidden_d), lambda i: (0, 0, 0)),  # w0,w1: resident
            pl.BlockSpec((hidden_d, LANE_PAD), lambda i: (0, 0)),        # w2 padded: resident
            pl.BlockSpec((8, hidden_d), lambda i: (0, 0)),               # b0,b1,gammas,betas
            pl.BlockSpec((1, LANE_PAD), lambda i: (0, 0)),               # b2 padded
        ],
        out_specs=pl.BlockSpec((tn, LANE_PAD), lambda i: (i, 0)),
        compiler_params=pltpu.CompilerParams(dimension_semantics=("parallel",)),
        cost_estimate=cost,
    )(x, w01, w2p, p32, b2p)

    return out_padded[:, :output_d]


def mlp_reference(x, weights, biases, gammas, betas):
    """Pure-JAX reference matching the PyTorch forward (two-pass LayerNorm)."""
    def ln(h, g, b):
        m = jnp.mean(h, axis=-1, keepdims=True)
        v = jnp.mean((h - m) ** 2, axis=-1, keepdims=True)
        return (h - m) * jax.lax.rsqrt(v + LN_EPS) * g + b

    def act(h, g, b):
        return jnp.maximum(ln(h, g, b), 0.0)

    h = act(x, gammas[0], betas[0])
    h = act(h @ weights[0] + biases[0], gammas[1], betas[1])
    h = act(h @ weights[1] + biases[1], gammas[2], betas[2])
    return h @ weights[2] + biases[2]


if __name__ == "__main__":
    N = 8  # small demo batch; kernel tiles/scales to arbitrary N

    key = jax.random.PRNGKey(0)
    key_x, key_p = jax.random.split(key)
    x = jax.random.normal(key_x, (N, INPUT_D), dtype=jnp.float32)
    weights, biases, gammas, betas = make_params(key_p)

    out = mlp_forward(x, weights, biases, gammas, betas)
    out = jax.block_until_ready(out)

    ref = mlp_reference(x, weights, biases, gammas, betas)
    assert out.shape == (N, OUTPUT_D)
    assert jnp.allclose(out, ref, atol=1e-4, rtol=1e-4), float(jnp.max(jnp.abs(out - ref)))

    print("KERNEL_OK")
</pallas_src>

<mosaic_0001>
module attributes {stable_mosaic.version = 11 : i64} {
  func.func @mlp_kernel(%arg0: i32, %arg1: memref<8x32xf32, #tpu.memory_space<vmem>>, %arg2: memref<2x32x32xf32, #tpu.memory_space<vmem>>, %arg3: memref<32x128xf32, #tpu.memory_space<vmem>>, %arg4: memref<8x32xf32, #tpu.memory_space<vmem>>, %arg5: memref<1x128xf32, #tpu.memory_space<vmem>>, %arg6: memref<8x128xf32, #tpu.memory_space<vmem>>) attributes {dimension_semantics = [#tpu.dimension_semantics<parallel>], iteration_bounds = array<i64: 1>, scalar_prefetch = 0 : i64, scratch_operands = 0 : i64, tpu.core_type = #tpu.core_type<tc>, window_params = [{transform_indices = @transform_0, window_bounds = array<i64: 8, 32>}, {pipeline_mode = #tpu.pipeline_mode<synchronous>, transform_indices = @transform_1, window_bounds = array<i64: 2, 32, 32>}, {pipeline_mode = #tpu.pipeline_mode<synchronous>, transform_indices = @transform_2, window_bounds = array<i64: 32, 128>}, {pipeline_mode = #tpu.pipeline_mode<synchronous>, transform_indices = @transform_3, window_bounds = array<i64: 8, 32>}, {pipeline_mode = #tpu.pipeline_mode<synchronous>, transform_indices = @transform_4, window_bounds = array<i64: 1, 128>}, {transform_indices = @transform_5, window_bounds = array<i64: 8, 128>}]} {
    %c0 = arith.constant 0 : index
    %c0_0 = arith.constant 0 : index
    %0 = vector.load %arg1[%c0, %c0_0] : memref<8x32xf32, #tpu.memory_space<vmem>>, vector<8x32xf32>
    %c2 = arith.constant 2 : index
    %c0_1 = arith.constant 0 : index
    %1 = vector.load %arg4[%c2, %c0_1] : memref<8x32xf32, #tpu.memory_space<vmem>>, vector<1x32xf32>
    %c5 = arith.constant 5 : index
    %c0_2 = arith.constant 0 : index
    %2 = vector.load %arg4[%c5, %c0_2] : memref<8x32xf32, #tpu.memory_space<vmem>>, vector<1x32xf32>
    %cst = arith.constant dense<0.000000e+00> : vector<8xf32>
    %3 = vector.multi_reduction <add>, %0, %cst [1] : vector<8x32xf32> to vector<8xf32>
    %4 = vector.shape_cast %3 : vector<8xf32> to vector<8x1xf32>
    %5 = arith.mulf %0, %0 : vector<8x32xf32>
    %cst_3 = arith.constant dense<0.000000e+00> : vector<8xf32>
    %6 = vector.multi_reduction <add>, %5, %cst_3 [1] : vector<8x32xf32> to vector<8xf32>
    %7 = vector.shape_cast %6 : vector<8xf32> to vector<8x1xf32>
    %cst_4 = arith.constant 3.125000e-02 : f32
    %8 = vector.broadcast %cst_4 : f32 to vector<8x1xf32>
    %9 = arith.mulf %4, %8 : vector<8x1xf32>
    %cst_5 = arith.constant 3.125000e-02 : f32
    %10 = vector.broadcast %cst_5 : f32 to vector<8x1xf32>
    %11 = arith.mulf %7, %10 : vector<8x1xf32>
    %12 = arith.mulf %9, %9 : vector<8x1xf32>
    %13 = arith.subf %11, %12 : vector<8x1xf32>
    %14 = vector.broadcast %9 : vector<8x1xf32> to vector<8x32xf32>
    %15 = arith.subf %0, %14 : vector<8x32xf32>
    %cst_6 = arith.constant 9.99999974E-6 : f32
    %16 = vector.broadcast %cst_6 : f32 to vector<8x1xf32>
    %17 = arith.addf %13, %16 : vector<8x1xf32>
    %18 = math.rsqrt %17 : vector<8x1xf32>
    %19 = vector.broadcast %18 : vector<8x1xf32> to vector<8x32xf32>
    %20 = arith.mulf %15, %19 : vector<8x32xf32>
    %21 = vector.broadcast %1 : vector<1x32xf32> to vector<8x32xf32>
    %22 = arith.mulf %20, %21 : vector<8x32xf32>
    %23 = vector.broadcast %2 : vector<1x32xf32> to vector<8x32xf32>
    %24 = arith.addf %22, %23 : vector<8x32xf32>
    %cst_7 = arith.constant 0.000000e+00 : f32
    %25 = vector.broadcast %cst_7 : f32 to vector<8x32xf32>
    %26 = arith.maximumf %24, %25 : vector<8x32xf32>
    %c0_8 = arith.constant 0 : index
    %c0_9 = arith.constant 0 : index
    %c0_10 = arith.constant 0 : index
    %27 = vector.load %arg2[%c0_8, %c0_9, %c0_10] : memref<2x32x32xf32, #tpu.memory_space<vmem>>, vector<1x32x32xf32>
    %28 = vector.shape_cast %27 : vector<1x32x32xf32> to vector<32x32xf32>
    %cst_11 = arith.constant dense<0.000000e+00> : vector<8x32xf32>
    %29 = tpu.matmul %26, %28, %cst_11 {dimension_numbers = #tpu.dot_dimension_numbers<[1], [0], [0], [1], [0, 0, 1, 1], [], []>} : vector<8x32xf32>, vector<32x32xf32>, vector<8x32xf32> -> vector<8x32xf32>
    %c0_12 = arith.constant 0 : index
    %c0_13 = arith.constant 0 : index
    %30 = vector.load %arg4[%c0_12, %c0_13] : memref<8x32xf32, #tpu.memory_space<vmem>>, vector<1x32xf32>
    %31 = vector.broadcast %30 : vector<1x32xf32> to vector<8x32xf32>
    %32 = arith.addf %29, %31 : vector<8x32xf32>
    %c3 = arith.constant 3 : index
    %c0_14 = arith.constant 0 : index
    %33 = vector.load %arg4[%c3, %c0_14] : memref<8x32xf32, #tpu.memory_space<vmem>>, vector<1x32xf32>
    %c6 = arith.constant 6 : index
    %c0_15 = arith.constant 0 : index
    %34 = vector.load %arg4[%c6, %c0_15] : memref<8x32xf32, #tpu.memory_space<vmem>>, vector<1x32xf32>
    %cst_16 = arith.constant dense<0.000000e+00> : vector<8xf32>
    %35 = vector.multi_reduction <add>, %32, %cst_16 [1] : vector<8x32xf32> to vector<8xf32>
    %36 = vector.shape_cast %35 : vector<8xf32> to vector<8x1xf32>
    %37 = arith.mulf %32, %32 : vector<8x32xf32>
    %cst_17 = arith.constant dense<0.000000e+00> : vector<8xf32>
    %38 = vector.multi_reduction <add>, %37, %cst_17 [1] : vector<8x32xf32> to vector<8xf32>
    %39 = vector.shape_cast %38 : vector<8xf32> to vector<8x1xf32>
    %cst_18 = arith.constant 3.125000e-02 : f32
    %40 = vector.broadcast %cst_18 : f32 to vector<8x1xf32>
    %41 = arith.mulf %36, %40 : vector<8x1xf32>
    %cst_19 = arith.constant 3.125000e-02 : f32
    %42 = vector.broadcast %cst_19 : f32 to vector<8x1xf32>
    %43 = arith.mulf %39, %42 : vector<8x1xf32>
    %44 = arith.mulf %41, %41 : vector<8x1xf32>
    %45 = arith.subf %43, %44 : vector<8x1xf32>
    %46 = vector.broadcast %41 : vector<8x1xf32> to vector<8x32xf32>
    %47 = arith.subf %32, %46 : vector<8x32xf32>
    %cst_20 = arith.constant 9.99999974E-6 : f32
    %48 = vector.broadcast %cst_20 : f32 to vector<8x1xf32>
    %49 = arith.addf %45, %48 : vector<8x1xf32>
    %50 = math.rsqrt %49 : vector<8x1xf32>
    %51 = vector.broadcast %50 : vector<8x1xf32> to vector<8x32xf32>
    %52 = arith.mulf %47, %51 : vector<8x32xf32>
    %53 = vector.broadcast %33 : vector<1x32xf32> to vector<8x32xf32>
    %54 = arith.mulf %52, %53 : vector<8x32xf32>
    %55 = vector.broadcast %34 : vector<1x32xf32> to vector<8x32xf32>
    %56 = arith.addf %54, %55 : vector<8x32xf32>
    %cst_21 = arith.constant 0.000000e+00 : f32
    %57 = vector.broadcast %cst_21 : f32 to vector<8x32xf32>
    %58 = arith.maximumf %56, %57 : vector<8x32xf32>
    %c1 = arith.constant 1 : index
    %c0_22 = arith.constant 0 : index
    %c0_23 = arith.constant 0 : index
    %59 = vector.load %arg2[%c1, %c0_22, %c0_23] : memref<2x32x32xf32, #tpu.memory_space<vmem>>, vector<1x32x32xf32>
    %60 = vector.shape_cast %59 : vector<1x32x32xf32> to vector<32x32xf32>
    %cst_24 = arith.constant dense<0.000000e+00> : vector<8x32xf32>
    %61 = tpu.matmul %58, %60, %cst_24 {dimension_numbers = #tpu.dot_dimension_numbers<[1], [0], [0], [1], [0, 0, 1, 1], [], []>} : vector<8x32xf32>, vector<32x32xf32>, vector<8x32xf32> -> vector<8x32xf32>
    %c1_25 = arith.constant 1 : index
    %c0_26 = arith.constant 0 : index
    %62 = vector.load %arg4[%c1_25, %c0_26] : memref<8x32xf32, #tpu.memory_space<vmem>>, vector<1x32xf32>
    %63 = vector.broadcast %62 : vector<1x32xf32> to vector<8x32xf32>
    %64 = arith.addf %61, %63 : vector<8x32xf32>
    %c4 = arith.constant 4 : index
    %c0_27 = arith.constant 0 : index
    %65 = vector.load %arg4[%c4, %c0_27] : memref<8x32xf32, #tpu.memory_space<vmem>>, vector<1x32xf32>
    %c7 = arith.constant 7 : index
    %c0_28 = arith.constant 0 : index
    %66 = vector.load %arg4[%c7, %c0_28] : memref<8x32xf32, #tpu.memory_space<vmem>>, vector<1x32xf32>
    %cst_29 = arith.constant dense<0.000000e+00> : vector<8xf32>
    %67 = vector.multi_reduction <add>, %64, %cst_29 [1] : vector<8x32xf32> to vector<8xf32>
    %68 = vector.shape_cast %67 : vector<8xf32> to vector<8x1xf32>
    %69 = arith.mulf %64, %64 : vector<8x32xf32>
    %cst_30 = arith.constant dense<0.000000e+00> : vector<8xf32>
    %70 = vector.multi_reduction <add>, %69, %cst_30 [1] : vector<8x32xf32> to vector<8xf32>
    %71 = vector.shape_cast %70 : vector<8xf32> to vector<8x1xf32>
    %cst_31 = arith.constant 3.125000e-02 : f32
    %72 = vector.broadcast %cst_31 : f32 to vector<8x1xf32>
    %73 = arith.mulf %68, %72 : vector<8x1xf32>
    %cst_32 = arith.constant 3.125000e-02 : f32
    %74 = vector.broadcast %cst_32 : f32 to vector<8x1xf32>
    %75 = arith.mulf %71, %74 : vector<8x1xf32>
    %76 = arith.mulf %73, %73 : vector<8x1xf32>
    %77 = arith.subf %75, %76 : vector<8x1xf32>
    %78 = vector.broadcast %73 : vector<8x1xf32> to vector<8x32xf32>
    %79 = arith.subf %64, %78 : vector<8x32xf32>
    %cst_33 = arith.constant 9.99999974E-6 : f32
    %80 = vector.broadcast %cst_33 : f32 to vector<8x1xf32>
    %81 = arith.addf %77, %80 : vector<8x1xf32>
    %82 = math.rsqrt %81 : vector<8x1xf32>
    %83 = vector.broadcast %82 : vector<8x1xf32> to vector<8x32xf32>
    %84 = arith.mulf %79, %83 : vector<8x32xf32>
    %85 = vector.broadcast %65 : vector<1x32xf32> to vector<8x32xf32>
    %86 = arith.mulf %84, %85 : vector<8x32xf32>
    %87 = vector.broadcast %66 : vector<1x32xf32> to vector<8x32xf32>
    %88 = arith.addf %86, %87 : vector<8x32xf32>
    %cst_34 = arith.constant 0.000000e+00 : f32
    %89 = vector.broadcast %cst_34 : f32 to vector<8x32xf32>
    %90 = arith.maximumf %88, %89 : vector<8x32xf32>
    %c0_35 = arith.constant 0 : index
    %c0_36 = arith.constant 0 : index
    %91 = vector.load %arg3[%c0_35, %c0_36] : memref<32x128xf32, #tpu.memory_space<vmem>>, vector<32x128xf32>
    %cst_37 = arith.constant dense<0.000000e+00> : vector<8x128xf32>
    %92 = tpu.matmul %90, %91, %cst_37 {dimension_numbers = #tpu.dot_dimension_numbers<[1], [0], [0], [1], [0, 0, 1, 1], [], []>} : vector<8x32xf32>, vector<32x128xf32>, vector<8x128xf32> -> vector<8x128xf32>
    %c0_38 = arith.constant 0 : index
    %c0_39 = arith.constant 0 : index
    %93 = vector.load %arg5[%c0_38, %c0_39] : memref<1x128xf32, #tpu.memory_space<vmem>>, vector<1x128xf32>
    %94 = vector.broadcast %93 : vector<1x128xf32> to vector<8x128xf32>
    %95 = arith.addf %92, %94 : vector<8x128xf32>
    %c0_40 = arith.constant 0 : index
    %c0_41 = arith.constant 0 : index
    %96 = vector.load %arg6[%c0_40, %c0_41] : memref<8x128xf32, #tpu.memory_space<vmem>>, vector<8x128xf32>
    tpu.vector_store %arg6[%c0_40, %c0_41], %95 {strides = array<i32>} : memref<8x128xf32, #tpu.memory_space<vmem>>, vector<8x128xf32>,
    return
  }
  func.func @transform_0(%arg0: i32) -> (i32, i32) {
    %c0_i32 = arith.constant 0 : i32
    %c0_i32_0 = arith.constant 0 : i32
    return %arg0, %c0_i32 : i32, i32
  }
  func.func @transform_1(%arg0: i32) -> (i32, i32, i32) {
    %c0_i32 = arith.constant 0 : i32
    %c0_i32_0 = arith.constant 0 : i32
    %c0_i32_1 = arith.constant 0 : i32
    %c0_i32_2 = arith.constant 0 : i32
    return %c0_i32, %c0_i32_0, %c0_i32_1 : i32, i32, i32
  }
  func.func @transform_2(%arg0: i32) -> (i32, i32) {
    %c0_i32 = arith.constant 0 : i32
    %c0_i32_0 = arith.constant 0 : i32
    %c0_i32_1 = arith.constant 0 : i32
    return %c0_i32, %c0_i32_0 : i32, i32
  }
  func.func @transform_3(%arg0: i32) -> (i32, i32) {
    %c0_i32 = arith.constant 0 : i32
    %c0_i32_0 = arith.constant 0 : i32
    %c0_i32_1 = arith.constant 0 : i32
    return %c0_i32, %c0_i32_0 : i32, i32
  }
  func.func @transform_4(%arg0: i32) -> (i32, i32) {
    %c0_i32 = arith.constant 0 : i32
    %c0_i32_0 = arith.constant 0 : i32
    %c0_i32_1 = arith.constant 0 : i32
    return %c0_i32, %c0_i32_0 : i32, i32
  }
  func.func @transform_5(%arg0: i32) -> (i32, i32) {
    %c0_i32 = arith.constant 0 : i32
    %c0_i32_0 = arith.constant 0 : i32
    return %arg0, %c0_i32 : i32, i32
  }
}

</mosaic_0001>

<llo_original>
// kernel: tpu_custom_call.1
$region0: #{tpu_custom_call.1}
  #allocation0 [shape = 'u32[]', space=smem, size = 0x4, offset = 0x4, fixed_abs, tag = 'smem constant byte address 0x4 - core index']
  #allocation1 [shape = 'u32[144,128]{1,0:T(1,128)}', space=vmem, size = 0x12000, scoped, tag = 'internal scratch']
  %s0 = inlined_call_operand.hbm [shape: f32[8,32], index: 0, kind: input, shape index: {}]
  %s1 = inlined_call_operand.hbm [shape: f32[2,32,32], index: 1, kind: input, shape index: {}]
  %s2 = inlined_call_operand.hbm [shape: f32[32,128], index: 2, kind: input, shape index: {}]
  %s3 = inlined_call_operand.hbm [shape: f32[8,32], index: 3, kind: input, shape index: {}]
  %s4 = inlined_call_operand.vmem [shape: f32[1,128], index: 4, kind: input, shape index: {}]
  %s5 = inlined_call_operand.hbm [shape: f32[8,128], index: 5, kind: output, shape index: {}]
  %s6 = sld [smem:[#allocation0]]
  $region46: #{tpu_custom_call.1} parent=0
    _
  %s8 = ssub.s32 1, %s6
  %s9 = scalar_select 0, %s8, %s6
  $region1: #{tpu_custom_call.1} parent=0
    #allocation2 [shape = 'u8[4096]{0}', space=vmem, size = 0x1000, scoped, tag = 'input window, operand 0, single buffered']
    #allocation3 [shape = 's32[1]{0}', space=sflag, size = 0x4, scoped, tag = 'scoped memory for tpu_custom_call.1']
    #allocation4 [shape = 's32[1]{0}', space=sflag, size = 0x4, scoped, tag = 'scoped memory for tpu_custom_call.1']
    #allocation5 [shape = 'u8[32768]{0}', space=vmem, size = 0x8000, scoped, tag = 'input window, operand 1, single buffered']
    #allocation6 [shape = 's32[1]{0}', space=sflag, size = 0x4, scoped, tag = 'scoped memory for tpu_custom_call.1']
    #allocation7 [shape = 'u8[16384]{0}', space=vmem, size = 0x4000, scoped, tag = 'input window, operand 2, single buffered']
    #allocation8 [shape = 'u8[4096]{0}', space=vmem, size = 0x1000, scoped, tag = 'input window, operand 3, single buffered']
    #allocation9 [shape = 's32[1]{0}', space=sflag, size = 0x4, scoped, tag = 'scoped memory for tpu_custom_call.1']
    #allocation10 [shape = 'u8[4096]{0}', space=vmem, size = 0x1000, scoped, tag = 'output window, operand 0, single buffered']
    %10 = vsyncpa [#allocation3], 0
    %11 = vsyncpa [#allocation6], 0
    %12 = vsyncpa [#allocation9], 0
    %13 = vsyncpa [#allocation4], 0
    // Predicated region
    $region2: #{tpu_custom_call.1} parent=1 // pred_check
      _
    $region3: #{tpu_custom_call.1} parent=1 // pred_check_branch
      %15 = sbr.rel (0) target = $region5
    $region4: #{tpu_custom_call.1} parent=1 // pred_region
      %s17 = ssub.s32 128, 128
      %18 = vsyncadd [#allocation3], %s17
      %s20 = sshll.u32 [#allocation2], 4
      %s21 = int_to_ptr.vmem [resolvable:$true] %s20
      %23 = dma.hbm_to_vmem [thread:$0]  %s0, 128, %s21, [#allocation3]
    $region5: #{tpu_custom_call.1} parent=1 // pred_fallthru
      _
    // Predicated region
    $region6: #{tpu_custom_call.1} parent=1 // pred_check
      _
    $region7: #{tpu_custom_call.1} parent=1 // pred_check_branch
      %25 = sbr.rel (0) target = $region9
    $region8: #{tpu_custom_call.1} parent=1 // pred_region
      %s27 = ssub.s32 1024, 1024
      %28 = vsyncadd [#allocation6], %s27
      %s29 = sshll.u32 [#allocation5], 4
      %s30 = int_to_ptr.vmem [resolvable:$true] %s29
      %35 = dma.hbm_to_vmem [thread:$0]  %s1, 1024, %s30, [#allocation6], 128, 128, 8
    $region9: #{tpu_custom_call.1} parent=1 // pred_fallthru
      _
    // Predicated region
    $region10: #{tpu_custom_call.1} parent=1 // pred_check
      _
    $region11: #{tpu_custom_call.1} parent=1 // pred_check_branch
      %37 = sbr.rel (0) target = $region13
    $region12: #{tpu_custom_call.1} parent=1 // pred_region
      %s39 = ssub.s32 512, 512
      %40 = vsyncadd [#allocation6], %s39
      %s41 = sshll.u32 [#allocation7], 4
      %s42 = int_to_ptr.vmem [resolvable:$true] %s41
      %47 = dma.hbm_to_vmem [thread:$0]  %s2, 512, %s42, [#allocation6], 128, 128, 8
    $region13: #{tpu_custom_call.1} parent=1 // pred_fallthru
      _
    // Predicated region
    $region14: #{tpu_custom_call.1} parent=1 // pred_check
      _
    $region15: #{tpu_custom_call.1} parent=1 // pred_check_branch
      %49 = sbr.rel (0) target = $region17
    $region16: #{tpu_custom_call.1} parent=1 // pred_region
      %s51 = ssub.s32 128, 128
      %52 = vsyncadd [#allocation9], %s51
      %s54 = sshll.u32 [#allocation8], 4
      %s55 = int_to_ptr.vmem [resolvable:$true] %s54
      %57 = dma.hbm_to_vmem [thread:$0]  %s3, 128, %s55, [#allocation9]
    $region17: #{tpu_custom_call.1} parent=1 // pred_fallthru
      _
    // Predicated region
    $region18: #{tpu_custom_call.1} parent=1 // pred_check
      _
    $region19: #{tpu_custom_call.1} parent=1 // pred_check_branch
      %59 = sbr.rel (0) target = $region21
    $region20: #{tpu_custom_call.1} parent=1 // pred_region
      _
    $region21: #{tpu_custom_call.1} parent=1 // pred_fallthru
      _
    // Predicated region
    $region22: #{tpu_custom_call.1} parent=1 // pred_check
      _
    $region23: #{tpu_custom_call.1} parent=1 // pred_check_branch
      %61 = sbr.rel (0) target = $region25
    $region24: #{tpu_custom_call.1} parent=1 // pred_region
      %62 = dma.done [#allocation3], 128
    $region25: #{tpu_custom_call.1} parent=1 // pred_fallthru
      _
    // Predicated region
    $region26: #{tpu_custom_call.1} parent=1 // pred_check
      _
    $region27: #{tpu_custom_call.1} parent=1 // pred_check_branch
      %64 = sbr.rel (0) target = $region29
    $region28: #{tpu_custom_call.1} parent=1 // pred_region
      %65 = dma.done [#allocation6], 1024
    $region29: #{tpu_custom_call.1} parent=1 // pred_fallthru
      _
    // Predicated region
    $region30: #{tpu_custom_call.1} parent=1 // pred_check
      _
    $region31: #{tpu_custom_call.1} parent=1 // pred_check_branch
      %67 = sbr.rel (0) target = $region33
    $region32: #{tpu_custom_call.1} parent=1 // pred_region
      %68 = dma.done [#allocation6], 512
    $region33: #{tpu_custom_call.1} parent=1 // pred_fallthru
      _
    // Predicated region
    $region34: #{tpu_custom_call.1} parent=1 // pred_check
      _
    $region35: #{tpu_custom_call.1} parent=1 // pred_check_branch
      %70 = sbr.rel (0) target = $region37
    $region36: #{tpu_custom_call.1} parent=1 // pred_region
      %71 = dma.done [#allocation9], 128
    $region37: #{tpu_custom_call.1} parent=1 // pred_fallthru
      _
    %v72 = vld [vmem:[#allocation2] sm:$0xff]
    %v73 = vld [vmem:[#allocation8 + $0x2] sm:$0x1]
    %v74 = vld [vmem:[#allocation8 + $0x5] sm:$0x1]
    %vm75 = vcmask 261120
    %v76 = vsel %vm75, %v72, 0.0
    %77 = vadd.xlane.f32.xlu0 %v76
    %v78 = vpop.xlane.xlu0 %77
    %v79 = vmul.f32 %v72, %v72
    %v80 = vsel %vm75, %v79, 0.0
    %81 = vadd.xlane.f32.xlu0 %v80
    %v82 = vpop.xlane.xlu0 %81
    %v83 = vmul.f32 %v78, 0.03125
    %v84 = vmul.f32 %v82, 0.03125
    %v85 = vmul.f32 %v83, %v83
    %v86 = vsub.f32 %v84, %v85
    %v87 = vsub.f32 %v72, %v83
    %v88 = vadd.f32 %v86, 1e-05
    %v89 = vrsqrt.pop %v88
    %v90 = vmul.f32 %v87, %v89
    %v91 = vlaneseq
    %v92 = vshrl.u32 %v91, 7
    %v93 = vsub.s32 0, %v92
    %v94 = vrot.slane %v73, %v93
    %v95 = vmul.f32 %v90, %v94
    %v96 = vlaneseq
    %v97 = vshrl.u32 %v96, 7
    %v98 = vsub.s32 0, %v97
    %v99 = vrot.slane %v74, %v98
    %v100 = vadd.f32 %v95, %v99
    %v101 = vmax.f32 %v100, 0.0
    %v102 = vld [vmem:[#allocation5] sm:$0xff]
    %v103 = vld [vmem:[#allocation5 + $0x8] sm:$0xff]
    %v104 = vld [vmem:[#allocation5 + $0x10] sm:$0xff]
    %v105 = vld [vmem:[#allocation5 + $0x18] sm:$0xff]
    %v106 = vld [vmem:[#allocation8] sm:$0x1]
    %v107 = vlaneseq
    %v108 = vshrl.u32 %v107, 7
    %v109 = vsub.s32 0, %v108
    %v110 = vrot.slane %v106, %v109
    %v112 = vsel %vm75, %v101, 0
    %114 = vmatprep.subr.mxu0 0.0
    %115 = vmatpush1.msra.mxu0 0.0
    %116 = vmatprep.subr.mxu0 0.0
    %117 = vmatpush1.msra.mxu0 0.0
    %118 = vmatprep.subr.mxu0 0.0
    %119 = vmatpush1.msra.mxu0 0.0
    %120 = vmatprep.subr.mxu0 0.0
    %121 = vmatpush1.msra.mxu0 0.0
    %122 = vmatprep.subr.mxu0 0.0
    %123 = vmatpush1.msra.mxu0 0.0
    %124 = vmatprep.subr.mxu0 0.0
    %125 = vmatpush1.msra.mxu0 0.0
    %126 = vmatprep.subr.mxu0 0.0
    %127 = vmatpush1.msra.mxu0 0.0
    %128 = vmatprep.subr.mxu0 0.0
    %129 = vmatpush1.msra.mxu0 0.0
    %130 = vmatprep.subr.mxu0 0.0
    %131 = vmatpush1.msra.mxu0 0.0
    %132 = vmatprep.subr.mxu0 0.0
    %133 = vmatpush1.msra.mxu0 0.0
    %134 = vmatprep.subr.mxu0 0.0
    %135 = vmatpush1.msra.mxu0 0.0
    %136 = vmatprep.subr.mxu0 0.0
    %137 = vmatpush1.msra.mxu0 0.0
    %138 = vmatprep.subr.mxu0 0.0
    %139 = vmatpush1.msra.mxu0 %v105
    %140 = vmatprep.subr.mxu0 0.0
    %141 = vmatpush1.msra.mxu0 %v104
    %142 = vmatprep.subr.mxu0 0.0
    %143 = vmatpush1.msra.mxu0 %v103
    %144 = vmatprep.subr.mxu0 0.0
    %145 = vmatpush1.msra.mxu0 %v102
    %146 = vmatprep.subr.mxu0 0.0
    %147 = vmatpush2.msra.mxu0 0.0
    %148 = vmatprep.subr.mxu0 0.0
    %149 = vmatpush2.msra.mxu0 0.0
    %150 = vmatprep.subr.mxu0 0.0
    %151 = vmatpush2.msra.mxu0 0.0
    %152 = vmatprep.subr.mxu0 0.0
    %153 = vmatpush2.msra.mxu0 0.0
    %154 = vmatprep.subr.mxu0 0.0
    %155 = vmatpush2.msra.mxu0 0.0
    %156 = vmatprep.subr.mxu0 0.0
    %157 = vmatpush2.msra.mxu0 0.0
    %158 = vmatprep.subr.mxu0 0.0
    %159 = vmatpush2.msra.mxu0 0.0
    %160 = vmatprep.subr.mxu0 0.0
    %161 = vmatpush2.msra.mxu0 0.0
    %162 = vmatprep.subr.mxu0 0.0
    %163 = vmatpush2.msra.mxu0 0.0
    %164 = vmatprep.subr.mxu0 0.0
    %165 = vmatpush2.msra.mxu0 0.0
    %166 = vmatprep.subr.mxu0 0.0
    %167 = vmatpush2.msra.mxu0 0.0
    %168 = vmatprep.subr.mxu0 0.0
    %169 = vmatpush2.msra.mxu0 0.0
    %170 = vmatprep.subr.mxu0 0.0
    %171 = vmatpush2.msra.mxu0 0.0
    %172 = vmatprep.subr.mxu0 0.0
    %173 = vmatpush2.msra.mxu0 0.0
    %174 = vmatprep.subr.mxu0 0.0
    %175 = vmatpush2.msra.mxu0 0.0
    %176 = vmatprep.subr.mxu0 0.0
    %177 = vmatpush2.msra.mxu0 0.0
    %178 = vmatprep.mubr.f32.mxu0 0.0
    %179 = vmatmul.mubr.f32.gmra.mxu0 %v112
    %v180 = vpop.f32.mrf.mxu0
    %v181 = vadd.f32 %v110, %v180
    %v182 = vpop.f32.mrf.mxu0
    %183 = vdwg.mxu0
    %v184 = vld [vmem:[#allocation8 + $0x3] sm:$0x1]
    %v185 = vld [vmem:[#allocation8 + $0x6] sm:$0x1]
    %v186 = vsel %vm75, %v181, 0.0
    %187 = vadd.xlane.f32.xlu0 %v186
    %v188 = vpop.xlane.xlu0 %187
    %v189 = vmul.f32 %v181, %v181
    %v190 = vsel %vm75, %v189, 0.0
    %191 = vadd.xlane.f32.xlu0 %v190
    %v192 = vpop.xlane.xlu0 %191
    %v193 = vmul.f32 %v188, 0.03125
    %v194 = vmul.f32 %v192, 0.03125
    %v195 = vmul.f32 %v193, %v193
    %v196 = vsub.f32 %v194, %v195
    %v197 = vsub.f32 %v181, %v193
    %v198 = vadd.f32 %v196, 1e-05
    %v199 = vrsqrt.pop %v198
    %v200 = vmul.f32 %v197, %v199
    %v201 = vlaneseq
    %v202 = vshrl.u32 %v201, 7
    %v203 = vsub.s32 0, %v202
    %v204 = vrot.slane %v184, %v203
    %v205 = vmul.f32 %v200, %v204
    %v206 = vlaneseq
    %v207 = vshrl.u32 %v206, 7
    %v208 = vsub.s32 0, %v207
    %v209 = vrot.slane %v185, %v208
    %v210 = vadd.f32 %v205, %v209
    %v211 = vmax.f32 %v210, 0.0
    %s212 = scalar_lea.vmem [#allocation5], 32
    %v213 = vld [vmem:[%s212] sm:$0xff]
    %v214 = vld [vmem:[%s212 + $0x8] sm:$0xff]
    %v215 = vld [vmem:[%s212 + $0x10] sm:$0xff]
    %v216 = vld [vmem:[%s212 + $0x18] sm:$0xff]
    %v217 = vld [vmem:[#allocation8 + $0x1] sm:$0x1]
    %v218 = vlaneseq
    %v219 = vshrl.u32 %v218, 7
    %v220 = vsub.s32 0, %v219
    %v221 = vrot.slane %v217, %v220
    %v223 = vsel %vm75, %v211, 0
    %225 = vmatprep.subr.mxu0 0.0
    %226 = vmatpush1.msra.mxu0 0.0
    %227 = vmatprep.subr.mxu0 0.0
    %228 = vmatpush1.msra.mxu0 0.0
    %229 = vmatprep.subr.mxu0 0.0
    %230 = vmatpush1.msra.mxu0 0.0
    %231 = vmatprep.subr.mxu0 0.0
    %232 = vmatpush1.msra.mxu0 0.0
    %233 = vmatprep.subr.mxu0 0.0
    %234 = vmatpush1.msra.mxu0 0.0
    %235 = vmatprep.subr.mxu0 0.0
    %236 = vmatpush1.msra.mxu0 0.0
    %237 = vmatprep.subr.mxu0 0.0
    %238 = vmatpush1.msra.mxu0 0.0
    %239 = vmatprep.subr.mxu0 0.0
    %240 = vmatpush1.msra.mxu0 0.0
    %241 = vmatprep.subr.mxu0 0.0
    %242 = vmatpush1.msra.mxu0 0.0
    %243 = vmatprep.subr.mxu0 0.0
    %244 = vmatpush1.msra.mxu0 0.0
    %245 = vmatprep.subr.mxu0 0.0
    %246 = vmatpush1.msra.mxu0 0.0
    %247 = vmatprep.subr.mxu0 0.0
    %248 = vmatpush1.msra.mxu0 0.0
    %249 = vmatprep.subr.mxu0 0.0
    %250 = vmatpush1.msra.mxu0 %v216
    %251 = vmatprep.subr.mxu0 0.0
    %252 = vmatpush1.msra.mxu0 %v215
    %253 = vmatprep.subr.mxu0 0.0
    %254 = vmatpush1.msra.mxu0 %v214
    %255 = vmatprep.subr.mxu0 0.0
    %256 = vmatpush1.msra.mxu0 %v213
    %257 = vmatprep.subr.mxu0 0.0
    %258 = vmatpush2.msra.mxu0 0.0
    %259 = vmatprep.subr.mxu0 0.0
    %260 = vmatpush2.msra.mxu0 0.0
    %261 = vmatprep.subr.mxu0 0.0
    %262 = vmatpush2.msra.mxu0 0.0
    %263 = vmatprep.subr.mxu0 0.0
    %264 = vmatpush2.msra.mxu0 0.0
    %265 = vmatprep.subr.mxu0 0.0
    %266 = vmatpush2.msra.mxu0 0.0
    %267 = vmatprep.subr.mxu0 0.0
    %268 = vmatpush2.msra.mxu0 0.0
    %269 = vmatprep.subr.mxu0 0.0
    %270 = vmatpush2.msra.mxu0 0.0
    %271 = vmatprep.subr.mxu0 0.0
    %272 = vmatpush2.msra.mxu0 0.0
    %273 = vmatprep.subr.mxu0 0.0
    %274 = vmatpush2.msra.mxu0 0.0
    %275 = vmatprep.subr.mxu0 0.0
    %276 = vmatpush2.msra.mxu0 0.0
    %277 = vmatprep.subr.mxu0 0.0
    %278 = vmatpush2.msra.mxu0 0.0
    %279 = vmatprep.subr.mxu0 0.0
    %280 = vmatpush2.msra.mxu0 0.0
    %281 = vmatprep.subr.mxu0 0.0
    %282 = vmatpush2.msra.mxu0 0.0
    %283 = vmatprep.subr.mxu0 0.0
    %284 = vmatpush2.msra.mxu0 0.0
    %285 = vmatprep.subr.mxu0 0.0
    %286 = vmatpush2.msra.mxu0 0.0
    %287 = vmatprep.subr.mxu0 0.0
    %288 = vmatpush2.msra.mxu0 0.0
    %289 = vmatprep.mubr.f32.mxu0 0.0
    %290 = vmatmul.mubr.f32.gmra.mxu0 %v223
    %v291 = vpop.f32.mrf.mxu0
    %v292 = vadd.f32 %v221, %v291
    %v293 = vpop.f32.mrf.mxu0
    %294 = vdwg.mxu0
    %v295 = vld [vmem:[#allocation8 + $0x4] sm:$0x1]
    %v296 = vld [vmem:[#allocation8 + $0x7] sm:$0x1]
    %v297 = vsel %vm75, %v292, 0.0
    %298 = vadd.xlane.f32.xlu0 %v297
    %v299 = vpop.xlane.xlu0 %298
    %v300 = vmul.f32 %v292, %v292
    %v301 = vsel %vm75, %v300, 0.0
    %302 = vadd.xlane.f32.xlu0 %v301
    %v303 = vpop.xlane.xlu0 %302
    %v304 = vmul.f32 %v299, 0.03125
    %v305 = vmul.f32 %v303, 0.03125
    %v306 = vmul.f32 %v304, %v304
    %v307 = vsub.f32 %v305, %v306
    %v308 = vsub.f32 %v292, %v304
    %v309 = vadd.f32 %v307, 1e-05
    %v310 = vrsqrt.pop %v309
    %v311 = vmul.f32 %v308, %v310
    %v312 = vlaneseq
    %v313 = vshrl.u32 %v312, 7
    %v314 = vsub.s32 0, %v313
    %v315 = vrot.slane %v295, %v314
    %v316 = vmul.f32 %v311, %v315
    %v317 = vlaneseq
    %v318 = vshrl.u32 %v317, 7
    %v319 = vsub.s32 0, %v318
    %v320 = vrot.slane %v296, %v319
    %v321 = vadd.f32 %v316, %v320
    %v322 = vmax.f32 %v321, 0.0
    %v323 = vld [vmem:[#allocation7] sm:$0xff]
    %v324 = vld [vmem:[#allocation7 + $0x8] sm:$0xff]
    %v325 = vld [vmem:[#allocation7 + $0x10] sm:$0xff]
    %v326 = vld [vmem:[#allocation7 + $0x18] sm:$0xff]
    %v327 = vld [vmem:[%s4] sm:$0x1]
    %v329 = vlaneseq
    %v330 = vshrl.u32 %v329, 7
    %v331 = vsub.s32 0, %v330
    %v332 = vrot.slane %v327, %v331
    %v335 = vsel %vm75, %v322, 0
    %337 = vmatprep.subr.mxu0 0.0
    %338 = vmatpush1.msra.mxu0 0.0
    %339 = vmatprep.subr.mxu0 0.0
    %340 = vmatpush1.msra.mxu0 0.0
    %341 = vmatprep.subr.mxu0 0.0
    %342 = vmatpush1.msra.mxu0 0.0
    %343 = vmatprep.subr.mxu0 0.0
    %344 = vmatpush1.msra.mxu0 0.0
    %345 = vmatprep.subr.mxu0 0.0
    %346 = vmatpush1.msra.mxu0 0.0
    %347 = vmatprep.subr.mxu0 0.0
    %348 = vmatpush1.msra.mxu0 0.0
    %349 = vmatprep.subr.mxu0 0.0
    %350 = vmatpush1.msra.mxu0 0.0
    %351 = vmatprep.subr.mxu0 0.0
    %352 = vmatpush1.msra.mxu0 0.0
    %353 = vmatprep.subr.mxu0 0.0
    %354 = vmatpush1.msra.mxu0 0.0
    %355 = vmatprep.subr.mxu0 0.0
    %356 = vmatpush1.msra.mxu0 0.0
    %357 = vmatprep.subr.mxu0 0.0
    %358 = vmatpush1.msra.mxu0 0.0
    %359 = vmatprep.subr.mxu0 0.0
    %360 = vmatpush1.msra.mxu0 0.0
    %361 = vmatprep.subr.mxu0 0.0
    %362 = vmatpush1.msra.mxu0 %v326
    %363 = vmatprep.subr.mxu0 0.0
    %364 = vmatpush1.msra.mxu0 %v325
    %365 = vmatprep.subr.mxu0 0.0
    %366 = vmatpush1.msra.mxu0 %v324
    %367 = vmatprep.subr.mxu0 0.0
    %368 = vmatpush1.msra.mxu0 %v323
    %369 = vmatprep.subr.mxu0 0.0
    %370 = vmatpush2.msra.mxu0 0.0
    %371 = vmatprep.subr.mxu0 0.0
    %372 = vmatpush2.msra.mxu0 0.0
    %373 = vmatprep.subr.mxu0 0.0
    %374 = vmatpush2.msra.mxu0 0.0
    %375 = vmatprep.subr.mxu0 0.0
    %376 = vmatpush2.msra.mxu0 0.0
    %377 = vmatprep.subr.mxu0 0.0
    %378 = vmatpush2.msra.mxu0 0.0
    %379 = vmatprep.subr.mxu0 0.0
    %380 = vmatpush2.msra.mxu0 0.0
    %381 = vmatprep.subr.mxu0 0.0
    %382 = vmatpush2.msra.mxu0 0.0
    %383 = vmatprep.subr.mxu0 0.0
    %384 = vmatpush2.msra.mxu0 0.0
    %385 = vmatprep.subr.mxu0 0.0
    %386 = vmatpush2.msra.mxu0 0.0
    %387 = vmatprep.subr.mxu0 0.0
    %388 = vmatpush2.msra.mxu0 0.0
    %389 = vmatprep.subr.mxu0 0.0
    %390 = vmatpush2.msra.mxu0 0.0
    %391 = vmatprep.subr.mxu0 0.0
    %392 = vmatpush2.msra.mxu0 0.0
    %393 = vmatprep.subr.mxu0 0.0
    %394 = vmatpush2.msra.mxu0 0.0
    %395 = vmatprep.subr.mxu0 0.0
    %396 = vmatpush2.msra.mxu0 0.0
    %397 = vmatprep.subr.mxu0 0.0
    %398 = vmatpush2.msra.mxu0 0.0
    %399 = vmatprep.subr.mxu0 0.0
    %400 = vmatpush2.msra.mxu0 0.0
    %401 = vmatprep.mubr.f32.mxu0 0.0
    %402 = vmatmul.mubr.f32.gmra.mxu0 %v335
    %v403 = vpop.f32.mrf.mxu0
    %v404 = vadd.f32 %v332, %v403
    %v405 = vpop.f32.mrf.mxu0
    %406 = vdwg.mxu0
    %407 = vst [vmem:[#allocation10] sm:$0xff] %v404
    // Predicated region
    $region38: #{tpu_custom_call.1} parent=1 // pred_check
      _
    $region39: #{tpu_custom_call.1} parent=1 // pred_check_branch
      %409 = sbr.rel (0) target = $region41
    $region40: #{tpu_custom_call.1} parent=1 // pred_region
      %s411 = ssub.s32 128, 128
      %412 = vsyncadd [#allocation4], %s411
      %s414 = sshll.u32 [#allocation10], 4
      %s415 = int_to_ptr.vmem [resolvable:$true] %s414
      %417 = dma.vmem_to_hbm [thread:$0]  %s415, 128, %s5, [#allocation4]
    $region41: #{tpu_custom_call.1} parent=1 // pred_fallthru
      _
    // Predicated region
    $region42: #{tpu_custom_call.1} parent=1 // pred_check
      _
    $region43: #{tpu_custom_call.1} parent=1 // pred_check_branch
      %419 = sbr.rel (0) target = $region45
    $region44: #{tpu_custom_call.1} parent=1 // pred_region
      %420 = dma.done [#allocation4], 128
    $region45: #{tpu_custom_call.1} parent=1 // pred_fallthru
      _
    %421 = vsyncpa [#allocation3], 1
    %422 = vsyncpa [#allocation6], 1
    %423 = vsyncpa [#allocation9], 1
    %424 = vsyncpa [#allocation4], 1

</llo_original>
